<compile_context>
chip_gen: v6e
topology: v6e:2x2x1
jax: 0.10.0
libtpu: 0.0.40
codegen_flags: <defaults>
</compile_context>

<pallas_src>
import math

import jax
import jax.numpy as jnp
from jax.experimental import pallas as pl
from jax.experimental.pallas import tpu as pltpu


_C_CHUNK = 8  # leading-dim reduction chunk (and C padding granularity)


def _compiler_params():
    cp_cls = getattr(pltpu, "CompilerParams", None)
    if cp_cls is None:  # older jax fallback
        cp_cls = getattr(pltpu, "TPUCompilerParams")
    return cp_cls(dimension_semantics=("parallel",),
                  vmem_limit_bytes=48 * 1024 * 1024)


# ----------------------------- Pallas kernels --------------------------------
def _score_tile(inp_ref, refg_ref):
    """S[t, p] = sum_c refg[c, t, p] * inp[c, 0, p] for the current HW tile.

    inp_ref  : (Cp, 1, TILE)  unfolded input features (lane tile)
    refg_ref : (Cp, T, TILE)  gathered (unfolded + L2-normalized) ref features
    returns  : (T, TILE) float32 scores
    """
    Cp, T, tile = refg_ref.shape
    nchunks = Cp // _C_CHUNK

    def body(i, acc):
        start = pl.multiple_of(i * _C_CHUNK, _C_CHUNK)
        blk = refg_ref[pl.ds(start, _C_CHUNK), :, :]     # (8, T, TILE)
        xin = inp_ref[pl.ds(start, _C_CHUNK), :, :]      # (8, 1, TILE)
        # broadcast over the candidate (sublane) axis, accumulate on the VPU
        return acc + jnp.sum(blk * xin, axis=0)          # (T, TILE)

    init = jnp.zeros((T, tile), jnp.float32)
    return jax.lax.fori_loop(0, nchunks, body, init)


def _best_kernel(inp_ref, refg_ref, best_ref):
    """First-occurrence argmax over candidates (matches torch.argmax)."""
    s = _score_tile(inp_ref, refg_ref)                   # (T, TILE)
    T = s.shape[0]
    smax = jnp.max(s, axis=0, keepdims=True)             # (1, TILE)
    t_iota = jax.lax.broadcasted_iota(jnp.int32, s.shape, 0)
    cand = jnp.where(s == smax, t_iota, T)
    best_ref[...] = jnp.min(cand, axis=0, keepdims=True)  # (1, TILE) int32


def _score_kernel(inp_ref, refg_ref, s_ref):
    """is_test=True path: emit the raw scores only."""
    s_ref[...] = _score_tile(inp_ref, refg_ref)


def _choose_tile(Cp, T, HW):
    """Largest HW (lane) tile whose double-buffered footprint fits the budget.

    Conservative budget (24 MiB) keeps the kernel within the default scoped
    VMEM on every generation (v5e 16 MiB default is raised via CompilerParams,
    v7x has only 64 MiB physical).
    """
    t_pad = pl.cdiv(T, 8) * 8
    # f32 bytes per lane: refg (Cp * t_pad sublanes) + inp ((Cp, 1, .) blocks
    # pad to 8 sublanes each) + small outputs; x2 for double buffering.
    per_lane = (Cp * (t_pad + 8) + 2 * t_pad) * 4 * 2
    budget = 24 * 1024 * 1024
    tile = 1024
    while tile > 128 and tile * per_lane > budget:
        tile //= 2
    hw128 = pl.cdiv(HW, 128) * 128
    return min(tile, hw128)


def _pallas_best(inp3, refg, tile):
    Cp, T, HWp = refg.shape
    return pl.pallas_call(
        _best_kernel,
        grid=(HWp // tile,),
        in_specs=[
            pl.BlockSpec((Cp, 1, tile), lambda i: (0, 0, i)),
            pl.BlockSpec((Cp, T, tile), lambda i: (0, 0, i)),
        ],
        out_specs=pl.BlockSpec((1, tile), lambda i: (0, i)),
        out_shape=jax.ShapeDtypeStruct((1, HWp), jnp.int32),
        compiler_params=_compiler_params(),
    )(inp3, refg)


def _pallas_scores(inp3, refg, tile):
    Cp, T, HWp = refg.shape
    return pl.pallas_call(
        _score_kernel,
        grid=(HWp // tile,),
        in_specs=[
            pl.BlockSpec((Cp, 1, tile), lambda i: (0, 0, i)),
            pl.BlockSpec((Cp, T, tile), lambda i: (0, 0, i)),
        ],
        out_specs=pl.BlockSpec((T, tile), lambda i: (0, i)),
        out_shape=jax.ShapeDtypeStruct((T, HWp), jnp.float32),
        compiler_params=_compiler_params(),
    )(inp3, refg)


# ------------------------------- JAX glue ------------------------------------
def _unfold3x3(x, padding):
    # F.unfold(x, kernel_size=3, padding=p) for x: (c, h, w)
    # -> (c*9, h_out, w_out); channel order = c-major then (ky, kx) like torch.
    c, h, w = x.shape
    xp = jnp.pad(x, ((0, 0), (padding, padding), (padding, padding)))
    ho, wo = h + 2 * padding - 2, w + 2 * padding - 2
    patches = [xp[:, ky:ky + ho, kx:kx + wo] for ky in range(3) for kx in range(3)]
    out = jnp.stack(patches, axis=1)                     # (c, 9, ho, wo)
    return out.reshape(c * 9, ho, wo).astype(jnp.float32)


def _normalized_unfold3x3(x, padding, eps=1e-12):
    # F.normalize(F.unfold(...), dim=1)
    u = _unfold3x3(x, padding)
    norm = jnp.sqrt(jnp.sum(u * u, axis=0, keepdims=True))
    return u / jnp.maximum(norm, eps)


def _propagation(inref_x, inref_y, dilation):
    # Propagation.forward: reflection-pad + one-hot 3x3 dilated conv3d
    # == 9 dilated spatial shifts of the current offset maps.
    k = int(dilation)

    def agg(a2d):
        h, w = a2d.shape
        ap = jnp.pad(a2d, ((k, k), (k, k)), mode='reflect')
        return jnp.stack(
            [ap[k * (j // 3): k * (j // 3) + h, k * (j % 3): k * (j % 3) + w]
             for j in range(9)], axis=0)                 # (9, h, w)

    return agg(inref_x[0]), agg(inref_y[0])


def _evaluate(input_map, ref_map, agg_x, agg_y, is_test=False):
    # Evaluate.forward.  The DeformSearch gather stays in XLA (data-dependent
    # per-lane gather); scoring + argmax run in the Pallas kernel.
    C, h, w = input_map.shape
    _, h1, w1 = ref_map.shape
    T = agg_x.shape[0]
    HW = h * w

    inp = input_map.reshape(C, HW).astype(jnp.float32)
    ref_flat = ref_map.reshape(C, h1 * w1).astype(jnp.float32)

    # pad feature dim to a multiple of the in-kernel reduction chunk (zeros
    # contribute nothing to the dot products)
    Cp = pl.cdiv(C, _C_CHUNK) * _C_CHUNK
    if Cp != C:
        inp = jnp.pad(inp, ((0, Cp - C), (0, 0)))
        ref_flat = jnp.pad(ref_flat, ((0, Cp - C), (0, 0)))

    tile = _choose_tile(Cp, T, HW)
    HWp = pl.cdiv(HW, tile) * tile

    # DeformSearch flat index x + y * w1, .long() truncation (values >= 0)
    idx = (agg_x + agg_y * w1).reshape(T, HW).astype(jnp.int32)
    if HWp != HW:
        inp = jnp.pad(inp, ((0, 0), (0, HWp - HW)))
        idx = jnp.pad(idx, ((0, 0), (0, HWp - HW)))      # 0 is a valid index

    # gather candidates directly in (C, T, HW) layout -- no transpose copy
    refg = jnp.take(ref_flat, idx, axis=1)               # (Cp, T, HWp)
    inp3 = inp[:, None, :]                                # (Cp, 1, HWp)

    if is_test:
        S = _pallas_scores(inp3, refg, tile)[:, :HW]      # (T, HW)
        return S.reshape(T, h, w)

    best = _pallas_best(inp3, refg, tile)[:, :HW]         # (1, HW) int32
    aggx = agg_x.reshape(T, HW)
    aggy = agg_y.reshape(T, HW)
    offx = jnp.take_along_axis(aggx, best, axis=0)        # (1, HW)
    offy = jnp.take_along_axis(aggy, best, axis=0)
    return offx.reshape(1, h, w), offy.reshape(1, h, w)


# PatchMatch constant buffers (deterministic, from __init__)
_XOFF = jnp.array([-1, 0, 1, -1, 0, 1, -1, 0, 1], jnp.float32).reshape(9, 1, 1)
_YOFF = jnp.array([-1, -1, -1, 0, 0, 0, 1, 1, 1], jnp.float32).reshape(9, 1, 1)
_DX = jnp.array([0, -1, -1, 0, 0, 0, 1, 1, 0], jnp.float32).reshape(9, 1, 1)
_DY = jnp.array([1, 0, 0, 1, 0, -1, 0, 0, -1], jnp.float32).reshape(9, 1, 1)


def _patch_match(input_map, ref_map, inref_x, inref_y, is_final,
                 iteration_count, input_minWH, ref_minWH):
    C, h, w = input_map.shape
    _, h1, w1 = ref_map.shape
    for prop_iter in range(iteration_count):
        k = 1
        while k <= input_minWH:
            agg_x, agg_y = _propagation(inref_x, inref_y, k)
            inref_x, inref_y = _evaluate(input_map, ref_map, agg_x, agg_y)
            k *= 2
        k = 1
        while k <= ref_minWH:
            agg_x = (inref_x + k * _XOFF + (prop_iter % k) * _DX + w1) % w1
            agg_y = (inref_y + k * _YOFF + (prop_iter % k) * _DY + h1) % h1
            inref_x, inref_y = _evaluate(input_map, ref_map, agg_x, agg_y)
            k *= 2
    if is_final:
        # TODO(synk): torch returns int64 indices; JAX default is int32 here.
        max_idx = (inref_y * w1 + inref_x).reshape(h, w).astype(jnp.int32)
        S = _evaluate(input_map, ref_map, inref_x, inref_y, is_test=True)
        return max_idx, S
    return inref_x, inref_y


def feature_match_index(feat_input2, feat_ref2, prymid_input, prymid_ref, key):
    # feat_input2 / feat_ref2: (c, h, w); prymid_*: list of (c, h_i, w_i),
    # finest level first (as in the reference, which iterates reversed()).
    _, h, w = feat_input2.shape
    _, h1, w1 = feat_ref2.shape
    input_minWH = min(h - 3, w - 3)
    ref_minWH = min(h1 - 3, w1 - 3)
    input_minWH = 2 ** math.floor(math.log2(input_minWH // 8))
    ref_minWH = 2 ** math.floor(math.log2(ref_minWH // 8))

    n = len(prymid_input)
    max_idx = S = None
    inref_x = inref_y = None
    wpre1 = hpre1 = None
    for i in range(n):
        feat_input = prymid_input[n - 1 - i]
        feat_ref = prymid_ref[n - 1 - i]
        if i == n - 1:
            input_map = _unfold3x3(feat_input, 0)
            ref_map = _normalized_unfold3x3(feat_ref, 0)
        else:
            input_map = _unfold3x3(feat_input, 1)
            ref_map = _normalized_unfold3x3(feat_ref, 1)
        C, h, w = input_map.shape
        _, h1, w1 = ref_map.shape
        if i == 0:
            kx, ky = jax.random.split(key)
            # torch.rand replaced by deterministic jax.random draw
            inref_x = jnp.round(jax.random.uniform(kx, (1, h, w)) * (w1 - 1))
            inref_y = jnp.round(jax.random.uniform(ky, (1, h, w)) * (h1 - 1))
            iteration_count = 1
            if i == n - 1:
                max_idx, S = _patch_match(input_map, ref_map, inref_x, inref_y,
                                          True, iteration_count,
                                          input_minWH, ref_minWH)
            else:
                inref_x, inref_y = _patch_match(input_map, ref_map, inref_x,
                                                inref_y, False, iteration_count,
                                                input_minWH, ref_minWH)
        else:
            inref_x = jnp.round(inref_x * (w1 - 1) / (wpre1 - 1))
            inref_y = jnp.round(inref_y * (h1 - 1) / (hpre1 - 1))
            inref_x = jnp.repeat(jnp.repeat(inref_x, 2, axis=1), 2, axis=2)
            inref_y = jnp.repeat(jnp.repeat(inref_y, 2, axis=1), 2, axis=2)
            if i == n - 1:
                iteration_count = 4
                inref_x = inref_x[:, 1:-1, 1:-1]
                inref_y = inref_y[:, 1:-1, 1:-1]
                max_idx, S = _patch_match(input_map, ref_map, inref_x, inref_y,
                                          True, iteration_count,
                                          input_minWH, ref_minWH)
            else:
                iteration_count = 1
                inref_x, inref_y = _patch_match(input_map, ref_map, inref_x,
                                                inref_y, False, iteration_count,
                                                input_minWH, ref_minWH)
        wpre1, hpre1 = w1, h1
    # match torch output shapes: max_idx -> (h, w); S -> (1, 1, h, w)
    return max_idx, S[None]


if __name__ == "__main__":
    key = jax.random.PRNGKey(0)
    k1, k2, k3, k4, k5 = jax.random.split(key, 5)
    c = 4
    # 2-level pyramid, finest (12x12) first, coarser (6x6) second.
    feat_input_fine = jax.random.normal(k1, (c, 12, 12), jnp.float32)
    feat_ref_fine = jax.random.normal(k2, (c, 12, 12), jnp.float32)
    feat_input_coarse = jax.random.normal(k3, (c, 6, 6), jnp.float32)
    feat_ref_coarse = jax.random.normal(k4, (c, 6, 6), jnp.float32)
    prymid_input = [feat_input_fine, feat_input_coarse]
    prymid_ref = [feat_ref_fine, feat_ref_coarse]

    max_idx, S = feature_match_index(feat_input_fine, feat_ref_fine,
                                     prymid_input, prymid_ref, k5)
    jax.block_until_ready((max_idx, S))
    assert max_idx.shape == (10, 10)
    assert S.shape == (1, 1, 10, 10)
    print("KERNEL_OK")
</pallas_src>

<mosaic_0001>
module attributes {stable_mosaic.version = 11 : i64} {
  func.func @_best_kernel(%arg0: i32, %arg1: memref<40x1x128xf32, #tpu.memory_space<vmem>>, %arg2: memref<40x9x128xf32, #tpu.memory_space<vmem>>, %arg3: memref<1x128xi32, #tpu.memory_space<vmem>>) attributes {dimension_semantics = [#tpu.dimension_semantics<parallel>], iteration_bounds = array<i64: 1>, scalar_prefetch = 0 : i64, scratch_operands = 0 : i64, tpu.core_type = #tpu.core_type<tc>, window_params = [{transform_indices = @transform_0, window_bounds = array<i64: 40, 1, 128>}, {transform_indices = @transform_1, window_bounds = array<i64: 40, 9, 128>}, {transform_indices = @transform_2, window_bounds = array<i64: 1, 128>}]} {
    %cst = arith.constant 0.000000e+00 : f32
    %0 = vector.broadcast %cst : f32 to vector<9x128xf32>
    %c0_i32 = arith.constant 0 : i32
    %c5_i32 = arith.constant 5 : i32
    %1 = arith.addi %c0_i32, %c5_i32 : i32
    %c1_i32 = arith.constant 1 : i32
    %2 = scf.for %arg4 = %c0_i32 to %1 step %c1_i32 iter_args(%arg5 = %0) -> (vector<9x128xf32>)  : i32 {
      %c8_i32 = arith.constant 8 : i32
      %13 = arith.muli %arg4, %c8_i32 : i32
      %14 = tpu.assume_multiple %13, 8 : i32
      %15 = arith.index_cast %14 : i32 to index
      %c0_4 = arith.constant 0 : index
      %c0_5 = arith.constant 0 : index
      %16 = vector.load %arg2[%15, %c0_4, %c0_5] : memref<40x9x128xf32, #tpu.memory_space<vmem>>, vector<8x9x128xf32>
      %17 = arith.index_cast %14 : i32 to index
      %c0_6 = arith.constant 0 : index
      %c0_7 = arith.constant 0 : index
      %18 = vector.load %arg1[%17, %c0_6, %c0_7] : memref<40x1x128xf32, #tpu.memory_space<vmem>>, vector<8x1x128xf32>
      %19 = vector.broadcast %18 : vector<8x1x128xf32> to vector<8x9x128xf32>
      %20 = arith.mulf %16, %19 : vector<8x9x128xf32>
      %cst_8 = arith.constant dense<0.000000e+00> : vector<9x128xf32>
      %21 = vector.multi_reduction <add>, %20, %cst_8 [0] : vector<8x9x128xf32> to vector<9x128xf32>
      %22 = arith.addf %arg5, %21 : vector<9x128xf32>
      scf.yield %22 : vector<9x128xf32>
    }
    %c5_i32_0 = arith.constant 5 : i32
    %cst_1 = arith.constant dense<0xFF800000> : vector<128xf32>
    %3 = vector.multi_reduction <maximumf>, %2, %cst_1 [0] : vector<9x128xf32> to vector<128xf32>
    %4 = vector.shape_cast %3 : vector<128xf32> to vector<1x128xf32>
    %5 = tpu.iota {dimensions = array<i32: 0>} : vector<9x128xi32>
    %6 = vector.broadcast %4 : vector<1x128xf32> to vector<9x128xf32>
    %7 = arith.cmpf oeq, %2, %6 : vector<9x128xf32>
    %c9_i32 = arith.constant 9 : i32
    %8 = vector.broadcast %c9_i32 : i32 to vector<9x128xi32>
    %9 = arith.select %7, %5, %8 : vector<9x128xi1>, vector<9x128xi32>
    %cst_2 = arith.constant dense<2147483647> : vector<128xi32>
    %10 = vector.multi_reduction <minsi>, %9, %cst_2 [0] : vector<9x128xi32> to vector<128xi32>
    %11 = vector.shape_cast %10 : vector<128xi32> to vector<1x128xi32>
    %c0 = arith.constant 0 : index
    %c0_3 = arith.constant 0 : index
    %12 = vector.load %arg3[%c0, %c0_3] : memref<1x128xi32, #tpu.memory_space<vmem>>, vector<1x128xi32>
    tpu.vector_store %arg3[%c0, %c0_3], %11 {strides = array<i32>} : memref<1x128xi32, #tpu.memory_space<vmem>>, vector<1x128xi32>,
    return
  }
  func.func @transform_0(%arg0: i32) -> (i32, i32, i32) {
    %c0_i32 = arith.constant 0 : i32
    %c0_i32_0 = arith.constant 0 : i32
    %c0_i32_1 = arith.constant 0 : i32
    return %c0_i32, %c0_i32_0, %arg0 : i32, i32, i32
  }
  func.func @transform_1(%arg0: i32) -> (i32, i32, i32) {
    %c0_i32 = arith.constant 0 : i32
    %c0_i32_0 = arith.constant 0 : i32
    %c0_i32_1 = arith.constant 0 : i32
    return %c0_i32, %c0_i32_0, %arg0 : i32, i32, i32
  }
  func.func @transform_2(%arg0: i32) -> (i32, i32) {
    %c0_i32 = arith.constant 0 : i32
    %c0_i32_0 = arith.constant 0 : i32
    return %c0_i32, %arg0 : i32, i32
  }
}

</mosaic_0001>

<llo_original>
// kernel: tpu_custom_call.1
$region0: #{tpu_custom_call.1}
  #allocation0 [shape = 'u32[]', space=smem, size = 0x4, offset = 0x4, fixed_abs, tag = 'smem constant byte address 0x4 - core index']
  #allocation1 [shape = 'u32[144,128]{1,0:T(1,128)}', space=vmem, size = 0x12000, scoped, tag = 'internal scratch']
  %s0 = inlined_call_operand.vmem [shape: f32[40,1,128], index: 0, kind: input, shape index: {}]
  %s1 = inlined_call_operand.vmem [shape: f32[40,9,128], index: 1, kind: input, shape index: {}]
  %s2 = inlined_call_operand.hbm [shape: s32[1,128], index: 2, kind: output, shape index: {}]
  %s3 = sld [smem:[#allocation0]]
  $region25: #{tpu_custom_call.1} parent=0
    _
  %s5 = ssub.s32 1, %s3
  %s6 = scalar_select 0, %s5, %s3
  $region1: #{tpu_custom_call.1} parent=0
    #allocation2 [shape = 'u8[512]{0}', space=vmem, size = 0x400, scoped, tag = 'output window, operand 0, single buffered']
    #allocation3 [shape = 's32[1]{0}', space=sflag, size = 0x4, scoped, tag = 'scoped memory for tpu_custom_call.1']
    %7 = vsyncpa [#allocation3], 0
    // Predicated region
    $region2: #{tpu_custom_call.1} parent=1 // pred_check
      _
    $region3: #{tpu_custom_call.1} parent=1 // pred_check_branch
      %9 = sbr.rel (0) target = $region5
    $region4: #{tpu_custom_call.1} parent=1 // pred_region
      _
    $region5: #{tpu_custom_call.1} parent=1 // pred_fallthru
      _
    // Predicated region
    $region6: #{tpu_custom_call.1} parent=1 // pred_check
      _
    $region7: #{tpu_custom_call.1} parent=1 // pred_check_branch
      %11 = sbr.rel (0) target = $region9
    $region8: #{tpu_custom_call.1} parent=1 // pred_region
      _
    $region9: #{tpu_custom_call.1} parent=1 // pred_fallthru
      _
    loop: start=0, step=1, limit=5
    $region10: #{tpu_custom_call.1} parent=1 // loop_pre_header
      _
    $region11: #{tpu_custom_call.1} parent=1 // loop_header
      %s13 = sphi 0, %s17
      %p14 = scmp.ge.s32.totalorder %s13, 5
      %v18 = vphi 0.0, %v135
      %v19 = vphi 0.0, %v136
    $region12: #{tpu_custom_call.1} parent=1 // loop_header_branch
      %16 = sbr.rel (%p14) target = $region16
    $region13: #{tpu_custom_call.1} parent=1 // loop_body
      %s20 = smul.u32 %s13, 8
      %s21 = smul.u32 %s20, 16
      %s22 = scalar_lea.vmem %s1, %s21
      %v23 = vld [vmem:[%s22] sm:$0xff]
      %v24 = vld [vmem:[%s22 + $0x8] sm:$0x1]
      %v25 = vld [vmem:[%s22 + $0x10] sm:$0xff]
      %v26 = vld [vmem:[%s22 + $0x18] sm:$0x1]
      %v27 = vld [vmem:[%s22 + $0x20] sm:$0xff]
      %v28 = vld [vmem:[%s22 + $0x28] sm:$0x1]
      %v29 = vld [vmem:[%s22 + $0x30] sm:$0xff]
      %v30 = vld [vmem:[%s22 + $0x38] sm:$0x1]
      %v31 = vld [vmem:[%s22 + $0x40] sm:$0xff]
      %v32 = vld [vmem:[%s22 + $0x48] sm:$0x1]
      %v33 = vld [vmem:[%s22 + $0x50] sm:$0xff]
      %v34 = vld [vmem:[%s22 + $0x58] sm:$0x1]
      %v35 = vld [vmem:[%s22 + $0x60] sm:$0xff]
      %v36 = vld [vmem:[%s22 + $0x68] sm:$0x1]
      %v37 = vld [vmem:[%s22 + $0x70] sm:$0xff]
      %v38 = vld [vmem:[%s22 + $0x78] sm:$0x1]
      %s39 = scalar_lea.vmem %s0, %s20
      %v40 = vld [vmem:[%s39] sm:$0x1]
      %v41 = vld [vmem:[%s39 + $0x1] sm:$0x1]
      %v42 = vld [vmem:[%s39 + $0x2] sm:$0x1]
      %v43 = vld [vmem:[%s39 + $0x3] sm:$0x1]
      %v44 = vld [vmem:[%s39 + $0x4] sm:$0x1]
      %v45 = vld [vmem:[%s39 + $0x5] sm:$0x1]
      %v46 = vld [vmem:[%s39 + $0x6] sm:$0x1]
      %v47 = vld [vmem:[%s39 + $0x7] sm:$0x1]
      %v56 = vlaneseq
      %v57 = vshrl.u32 %v56, 7
      %v58 = vsub.s32 0, %v57
      %v59 = vrot.slane %v40, %v58
      %v60 = vlaneseq
      %v61 = vshrl.u32 %v60, 7
      %v62 = vsub.s32 0, %v61
      %v63 = vrot.slane %v41, %v62
      %v64 = vlaneseq
      %v65 = vshrl.u32 %v64, 7
      %v66 = vsub.s32 0, %v65
      %v67 = vrot.slane %v42, %v66
      %v68 = vlaneseq
      %v69 = vshrl.u32 %v68, 7
      %v70 = vsub.s32 0, %v69
      %v71 = vrot.slane %v43, %v70
      %v72 = vlaneseq
      %v73 = vshrl.u32 %v72, 7
      %v74 = vsub.s32 0, %v73
      %v75 = vrot.slane %v44, %v74
      %v76 = vlaneseq
      %v77 = vshrl.u32 %v76, 7
      %v78 = vsub.s32 0, %v77
      %v79 = vrot.slane %v45, %v78
      %v80 = vlaneseq
      %v81 = vshrl.u32 %v80, 7
      %v82 = vsub.s32 0, %v81
      %v83 = vrot.slane %v46, %v82
      %v84 = vlaneseq
      %v85 = vshrl.u32 %v84, 7
      %v86 = vsub.s32 0, %v85
      %v87 = vrot.slane %v47, %v86
      %v96 = vmul.f32 %v23, %v59
      %v97 = vmul.f32 %v24, %v59
      %v98 = vmul.f32 %v25, %v63
      %v99 = vmul.f32 %v26, %v63
      %v100 = vmul.f32 %v27, %v67
      %v101 = vmul.f32 %v28, %v67
      %v102 = vmul.f32 %v29, %v71
      %v103 = vmul.f32 %v30, %v71
      %v104 = vmul.f32 %v31, %v75
      %v105 = vmul.f32 %v32, %v75
      %v106 = vmul.f32 %v33, %v79
      %v107 = vmul.f32 %v34, %v79
      %v108 = vmul.f32 %v35, %v83
      %v109 = vmul.f32 %v36, %v83
      %v110 = vmul.f32 %v37, %v87
      %v111 = vmul.f32 %v38, %v87
      %v112 = vadd.f32 %v96, %v98
      %v113 = vadd.f32 %v112, %v100
      %v114 = vadd.f32 %v113, %v102
      %v115 = vadd.f32 %v114, %v104
      %v116 = vadd.f32 %v115, %v106
      %v117 = vadd.f32 %v116, %v108
      %v118 = vadd.f32 %v117, %v110
      %vm119 = vcmask 1040384
      %v120 = vsel %vm119, %v97, 0.0
      %v121 = vsel %vm119, %v99, 0.0
      %v122 = vadd.f32 %v120, %v121
      %v123 = vsel %vm119, %v101, 0.0
      %v124 = vadd.f32 %v122, %v123
      %v125 = vsel %vm119, %v103, 0.0
      %v126 = vadd.f32 %v124, %v125
      %v127 = vsel %vm119, %v105, 0.0
      %v128 = vadd.f32 %v126, %v127
      %v129 = vsel %vm119, %v107, 0.0
      %v130 = vadd.f32 %v128, %v129
      %v131 = vsel %vm119, %v109, 0.0
      %v132 = vadd.f32 %v130, %v131
      %v133 = vsel %vm119, %v111, 0.0
      %v134 = vadd.f32 %v132, %v133
      %v135 = vadd.f32 %v18, %v118
      %v136 = vadd.f32 %v19, %v134
    $region14: #{tpu_custom_call.1} parent=1 // loop_footer
      %s17 = sadd.s32 1, %s13
    $region15: #{tpu_custom_call.1} parent=1 // loop_footer_branch
      %12 = sbr.rel target = $region11
    $region16: #{tpu_custom_call.1} parent=1 // loop_exit
      _
    %vm137 = vcmask 1040384
    %v138 = vsel %vm137, %v19, -inf
    %v139 = vmax.f32 %v18, %v138
    %v140 = vrot.slane %v139, 4
    %v141 = vmax.f32 %v139, %v140
    %v142 = vrot.slane %v141, 2
    %v143 = vmax.f32 %v141, %v142
    %v144 = vrot.slane %v143, 1
    %v145 = vmax.f32 %v143, %v144
    %v146 = vlaneseq
    %v147 = vshrl.u32 %v146, 7
    %v148 = vadd.s32 %v147, 8
    %vm149 = vcmp.eq.f32.partialorder %v18, %v145
    %vm150 = vcmp.eq.f32.partialorder %v19, %v145
    %v151 = vsel %vm149, %v147, 9
    %v152 = vsel %vm150, %v148, 9
    %v153 = vsel %vm137, %v152, 2147483647
    %vm154 = vcmp.lt.s32.totalorder %v151, %v153
    %v155 = vsel %vm154, %v151, %v153
    %v156 = vrot.slane %v155, 4
    %vm157 = vcmp.lt.s32.totalorder %v155, %v156
    %v158 = vsel %vm157, %v155, %v156
    %v159 = vrot.slane %v158, 2
    %vm160 = vcmp.lt.s32.totalorder %v158, %v159
    %v161 = vsel %vm160, %v158, %v159
    %v162 = vrot.slane %v161, 1
    %vm163 = vcmp.lt.s32.totalorder %v161, %v162
    %v164 = vsel %vm163, %v161, %v162
    %165 = vst [vmem:[#allocation2] sm:$0x1] %v164
    // Predicated region
    $region17: #{tpu_custom_call.1} parent=1 // pred_check
      _
    $region18: #{tpu_custom_call.1} parent=1 // pred_check_branch
      %167 = sbr.rel (0) target = $region20
    $region19: #{tpu_custom_call.1} parent=1 // pred_region
      %s169 = ssub.s32 16, 16
      %170 = vsyncadd [#allocation3], %s169
      %s172 = sshll.u32 [#allocation2], 4
      %s173 = int_to_ptr.vmem [resolvable:$true] %s172
      %175 = dma.vmem_to_hbm [thread:$0]  %s173, 16, %s2, [#allocation3]
    $region20: #{tpu_custom_call.1} parent=1 // pred_fallthru
      _
    // Predicated region
    $region21: #{tpu_custom_call.1} parent=1 // pred_check
      _
    $region22: #{tpu_custom_call.1} parent=1 // pred_check_branch
      %177 = sbr.rel (0) target = $region24
    $region23: #{tpu_custom_call.1} parent=1 // pred_region
      %178 = dma.done [#allocation3], 16
    $region24: #{tpu_custom_call.1} parent=1 // pred_fallthru
      _
    %179 = vsyncpa [#allocation3], 1

</llo_original>
